<compile_context>
chip_gen: v5e
topology: v5e:2x2
jax: 0.10.0
libtpu: 0.0.40
codegen_flags: <defaults>
</compile_context>

<pallas_src>
import functools

import jax
import jax.numpy as jnp
from jax.experimental import pallas as pl
from jax.experimental.pallas import tpu as pltpu


def _agn_kernel(x_ref, ss_ref, o_ref, *, eps):
    # x_ref : (GB, cpg, HW)  GB whole (batch, group) rows; cpg channels per group
    # ss_ref: (GB, cpg, 2)   [..., 0] = scale + 1, [..., 1] = shift (time-conditioned, hoisted)
    # o_ref : (GB, cpg, HW)
    xf = x_ref[...].astype(jnp.float32)                     # keep f32 copy; reused for the FMA
    gb, cpg, hw = xf.shape
    inv_n = jnp.float32(1.0 / (cpg * hw))

    # Per-(batch, group) statistics: lane reduce then sublane reduce, accumulated in f32.
    row_sum = jnp.sum(xf, axis=2, keepdims=True)            # (GB, cpg, 1)
    row_sumsq = jnp.sum(xf * xf, axis=2, keepdims=True)     # (GB, cpg, 1)
    gsum = jnp.sum(row_sum, axis=1, keepdims=True)          # (GB, 1, 1)
    gsumsq = jnp.sum(row_sumsq, axis=1, keepdims=True)      # (GB, 1, 1)

    mean = gsum * inv_n
    var = jnp.maximum(gsumsq * inv_n - mean * mean, 0.0)    # biased var, clamp cancellation
    inv = jax.lax.rsqrt(var + eps)                          # (GB, 1, 1)

    # Normalize + affine folded into one per-channel f32 FMA: out = xf * a + c.
    ss = ss_ref[...].astype(jnp.float32)                    # (GB, cpg, 2)
    a = inv * ss[:, :, 0:1]                                 # (GB, cpg, 1); scale+1 precomputed
    c = ss[:, :, 1:2] - mean * a                            # (GB, cpg, 1)
    o_ref[...] = (xf * a + c).astype(o_ref.dtype)


def _vmem_capacity_bytes(default=64 * 1024 * 1024):
    """Per-core VMEM capacity (conservative default = v7x's 64 MiB)."""
    try:
        info = pltpu.get_tpu_info()
        cap = getattr(info, "vmem_capacity_bytes", None)
        return int(cap) if cap else default
    except Exception:
        return default


def _pick_group_block(n_rows, cpg, hw, in_bytes, out_bytes):
    """Pick GB = number of (batch, group) rows per block, and a vmem limit.

    Byte- and temp-aware: accounts for the padded VMEM layout (sublanes to x8, lanes to x128),
    double-buffered input+output blocks, and ~3 full-block f32 temporaries inside the kernel.
    Keeps the grid >= 2 (preferably even) so both v7x TensorCores get work.
    """
    vmem_cap = _vmem_capacity_bytes()
    pad_cpg = ((cpg + 7) // 8) * 8
    pad_hw = ((hw + 127) // 128) * 128
    slab = pad_cpg * pad_hw                                  # padded elems of one row in VMEM
    per_elem = 2 * in_bytes + 2 * out_bytes + 3 * 4          # 2x in, 2x out bufs + 3 f32 temps

    vmem_limit = max(32 << 20, min(int(0.6 * vmem_cap), 80 << 20))
    budget = vmem_limit - (6 << 20)                          # headroom for internal scratch
    # Small x-blocks on 64 MiB parts (v7x); >=512-lane tiles already sit at ~85% of HBM roofline.
    x_block_cap = (2 << 20) if vmem_cap <= (64 << 20) else (8 << 20)

    max_gb = max(1, min(budget // (slab * per_elem), x_block_cap // (slab * in_bytes)))

    divisors = [d for d in range(1, n_rows + 1) if n_rows % d == 0]
    fit = [d for d in divisors if d <= max_gb]
    if not fit:
        gb = 1  # a single whole group never fits the budget: take the smallest legal block
        # TODO(synk): groups whose single-row working set exceeds VMEM would need a streamed
        # two-pass stats variant; not needed for UNet-scale shapes.
    else:
        even = [d for d in fit if (n_rows // d) % 2 == 0]
        ge2 = [d for d in fit if (n_rows // d) >= 2]
        gb = max(even) if even else (max(ge2) if ge2 else max(fit))

    est = gb * slab * per_elem + (6 << 20)
    vmem_limit = max(vmem_limit, min(est, int(0.9 * vmem_cap)))
    return gb, int(vmem_limit)


def adaptive_group_norm(x, time_emb, w, b, num_groups, eps=1e-5):
    """x: (N, C, H, W) NCHW, time_emb: (N, T), w: (2C, T), b: (2C,)."""
    N, C, H, W = x.shape
    assert C % num_groups == 0
    HW = H * W
    cpg = C // num_groups
    n_rows = N * num_groups

    # Hoisted time_emb_proj (SiLU + Linear): one full-width matmul for all batch elements.
    silu = time_emb * jax.nn.sigmoid(time_emb)
    ss = silu @ w.T + b                                      # (N, 2C)
    scale1 = ss[:, :C] + 1.0                                 # fold the "+1" here
    shift = ss[:, C:]
    ss_stacked = jnp.stack([scale1, shift], axis=-1)         # (N, C, 2)
    ss_rows = ss_stacked.reshape(n_rows, cpg, 2)             # metadata-only

    # Contiguous NCHW -> (batch*group, cpg, HW): metadata-only reshape, no transpose.
    x_rows = x.reshape(n_rows, cpg, HW)

    GB, vmem_limit = _pick_group_block(n_rows, cpg, HW, x.dtype.itemsize, x.dtype.itemsize)
    grid = (n_rows // GB,)

    out_rows = pl.pallas_call(
        functools.partial(_agn_kernel, eps=float(eps)),
        out_shape=jax.ShapeDtypeStruct((n_rows, cpg, HW), x.dtype),
        grid=grid,
        in_specs=[
            pl.BlockSpec((GB, cpg, HW), lambda i: (i, 0, 0)),
            pl.BlockSpec((GB, cpg, 2), lambda i: (i, 0, 0)),
        ],
        out_specs=pl.BlockSpec((GB, cpg, HW), lambda i: (i, 0, 0)),
        compiler_params=pltpu.CompilerParams(
            dimension_semantics=("parallel",),
            vmem_limit_bytes=vmem_limit,
        ),
    )(x_rows, ss_rows)

    return out_rows.reshape(N, C, H, W)


def adaptive_group_norm_ref(x, time_emb, w, b, num_groups, eps=1e-5):
    """Pure-JAX reference mirroring the PyTorch module."""
    N, C, H, W = x.shape
    xg = x.reshape(N, num_groups, -1)
    mean = xg.mean(-1, keepdims=True)
    var = xg.var(-1, keepdims=True)  # biased, like torch GroupNorm
    xn = ((xg - mean) / jnp.sqrt(var + eps)).reshape(N, C, H, W)
    silu = time_emb * jax.nn.sigmoid(time_emb)
    ss = silu @ w.T + b
    scale, shift = ss[:, :C], ss[:, C:]
    return xn * (scale[:, :, None, None] + 1.0) + shift[:, :, None, None]


if __name__ == "__main__":
    N, C, H, W = 2, 4, 16, 16
    num_groups = 2
    T = 32  # time_emb_dim

    key = jax.random.PRNGKey(0)
    kx, kt, kw, kb = jax.random.split(key, 4)
    x = jax.random.normal(kx, (N, C, H, W), dtype=jnp.float32)
    time_emb = jax.random.normal(kt, (N, T), dtype=jnp.float32)
    # Deterministic synthetic parameters for nn.Linear(time_emb_dim, 2*C)
    w = jax.random.normal(kw, (2 * C, T), dtype=jnp.float32) * 0.1
    b = jax.random.normal(kb, (2 * C,), dtype=jnp.float32) * 0.1

    out = adaptive_group_norm(x, time_emb, w, b, num_groups)
    out = jax.block_until_ready(out)

    ref = adaptive_group_norm_ref(x, time_emb, w, b, num_groups)
    assert out.shape == (N, C, H, W)
    assert jnp.allclose(out, ref, atol=2e-4, rtol=2e-4), float(jnp.abs(out - ref).max())

    print("KERNEL_OK")
</pallas_src>

<mosaic_0001>
module attributes {stable_mosaic.version = 11 : i64} {
  func.func @_agn_kernel(%arg0: i32, %arg1: memref<2x2x256xf32, #tpu.memory_space<vmem>>, %arg2: memref<2x2x2xf32, #tpu.memory_space<vmem>>, %arg3: memref<2x2x256xf32, #tpu.memory_space<vmem>>) attributes {dimension_semantics = [#tpu.dimension_semantics<parallel>], iteration_bounds = array<i64: 2>, scalar_prefetch = 0 : i64, scratch_operands = 0 : i64, tpu.core_type = #tpu.core_type<tc>, window_params = [{transform_indices = @transform_0, window_bounds = array<i64: 2, 2, 256>}, {transform_indices = @transform_1, window_bounds = array<i64: 2, 2, 2>}, {transform_indices = @transform_2, window_bounds = array<i64: 2, 2, 256>}]} {
    %c0 = arith.constant 0 : index
    %c0_0 = arith.constant 0 : index
    %c0_1 = arith.constant 0 : index
    %0 = vector.load %arg1[%c0, %c0_0, %c0_1] : memref<2x2x256xf32, #tpu.memory_space<vmem>>, vector<2x2x256xf32>
    %cst = arith.constant dense<0.000000e+00> : vector<2x2xf32>
    %1 = vector.multi_reduction <add>, %0, %cst [2] : vector<2x2x256xf32> to vector<2x2xf32>
    %2 = vector.shape_cast %1 : vector<2x2xf32> to vector<2x2x1xf32>
    %3 = arith.mulf %0, %0 : vector<2x2x256xf32>
    %cst_2 = arith.constant dense<0.000000e+00> : vector<2x2xf32>
    %4 = vector.multi_reduction <add>, %3, %cst_2 [2] : vector<2x2x256xf32> to vector<2x2xf32>
    %5 = vector.shape_cast %4 : vector<2x2xf32> to vector<2x2x1xf32>
    %cst_3 = arith.constant dense<0.000000e+00> : vector<2x1xf32>
    %6 = vector.multi_reduction <add>, %2, %cst_3 [1] : vector<2x2x1xf32> to vector<2x1xf32>
    %7 = vector.shape_cast %6 : vector<2x1xf32> to vector<2x1x1xf32>
    %cst_4 = arith.constant dense<0.000000e+00> : vector<2x1xf32>
    %8 = vector.multi_reduction <add>, %5, %cst_4 [1] : vector<2x2x1xf32> to vector<2x1xf32>
    %9 = vector.shape_cast %8 : vector<2x1xf32> to vector<2x1x1xf32>
    %cst_5 = arith.constant 0.001953125 : f32
    %10 = vector.broadcast %cst_5 : f32 to vector<2x1x1xf32>
    %11 = arith.mulf %7, %10 : vector<2x1x1xf32>
    %cst_6 = arith.constant 0.001953125 : f32
    %12 = vector.broadcast %cst_6 : f32 to vector<2x1x1xf32>
    %13 = arith.mulf %9, %12 : vector<2x1x1xf32>
    %14 = arith.mulf %11, %11 : vector<2x1x1xf32>
    %15 = arith.subf %13, %14 : vector<2x1x1xf32>
    %cst_7 = arith.constant 0.000000e+00 : f32
    %16 = vector.broadcast %cst_7 : f32 to vector<2x1x1xf32>
    %17 = arith.maximumf %15, %16 : vector<2x1x1xf32>
    %cst_8 = arith.constant 9.99999974E-6 : f32
    %18 = vector.broadcast %cst_8 : f32 to vector<2x1x1xf32>
    %19 = arith.addf %17, %18 : vector<2x1x1xf32>
    %20 = math.rsqrt %19 : vector<2x1x1xf32>
    %c0_9 = arith.constant 0 : index
    %c0_10 = arith.constant 0 : index
    %c0_11 = arith.constant 0 : index
    %21 = vector.load %arg2[%c0_9, %c0_10, %c0_11] : memref<2x2x2xf32, #tpu.memory_space<vmem>>, vector<2x2x2xf32>
    %22 = vector.extract_strided_slice %21 {offsets = [0, 0, 0], sizes = [2, 2, 1], strides = [1, 1, 1]} : vector<2x2x2xf32> to vector<2x2x1xf32>
    %23 = vector.broadcast %20 : vector<2x1x1xf32> to vector<2x2x1xf32>
    %24 = arith.mulf %23, %22 : vector<2x2x1xf32>
    %25 = vector.extract_strided_slice %21 {offsets = [0, 0, 1], sizes = [2, 2, 1], strides = [1, 1, 1]} : vector<2x2x2xf32> to vector<2x2x1xf32>
    %26 = vector.broadcast %11 : vector<2x1x1xf32> to vector<2x2x1xf32>
    %27 = arith.mulf %26, %24 : vector<2x2x1xf32>
    %28 = arith.subf %25, %27 : vector<2x2x1xf32>
    %29 = vector.broadcast %24 : vector<2x2x1xf32> to vector<2x2x256xf32>
    %30 = arith.mulf %0, %29 : vector<2x2x256xf32>
    %31 = vector.broadcast %28 : vector<2x2x1xf32> to vector<2x2x256xf32>
    %32 = arith.addf %30, %31 : vector<2x2x256xf32>
    %c0_12 = arith.constant 0 : index
    %c0_13 = arith.constant 0 : index
    %c0_14 = arith.constant 0 : index
    %33 = vector.load %arg3[%c0_12, %c0_13, %c0_14] : memref<2x2x256xf32, #tpu.memory_space<vmem>>, vector<2x2x256xf32>
    tpu.vector_store %arg3[%c0_12, %c0_13, %c0_14], %32 {strides = array<i32>} : memref<2x2x256xf32, #tpu.memory_space<vmem>>, vector<2x2x256xf32>,
    return
  }
  func.func @transform_0(%arg0: i32) -> (i32, i32, i32) {
    %c0_i32 = arith.constant 0 : i32
    %c0_i32_0 = arith.constant 0 : i32
    %c0_i32_1 = arith.constant 0 : i32
    return %arg0, %c0_i32, %c0_i32_0 : i32, i32, i32
  }
  func.func @transform_1(%arg0: i32) -> (i32, i32, i32) {
    %c0_i32 = arith.constant 0 : i32
    %c0_i32_0 = arith.constant 0 : i32
    %c0_i32_1 = arith.constant 0 : i32
    return %arg0, %c0_i32, %c0_i32_0 : i32, i32, i32
  }
  func.func @transform_2(%arg0: i32) -> (i32, i32, i32) {
    %c0_i32 = arith.constant 0 : i32
    %c0_i32_0 = arith.constant 0 : i32
    %c0_i32_1 = arith.constant 0 : i32
    return %arg0, %c0_i32, %c0_i32_0 : i32, i32, i32
  }
}

</mosaic_0001>

<llo_original>
// kernel: tpu_custom_call.1
$region0: #{tpu_custom_call.1}
  #allocation0 [shape = 'u32[]', space=smem, size = 0x4, offset = 0x4, fixed_abs, tag = 'smem constant byte address 0x4 - core index']
  #allocation1 [shape = 'u32[72,128]{1,0:T(1,128)}', space=vmem, size = 0x9000, scoped, tag = 'internal scratch']
  %s0 = inlined_call_operand.hbm [shape: f32[4,2,256], index: 0, kind: input, shape index: {}]
  %s1 = inlined_call_operand.vmem [shape: f32[4,2,2], index: 1, kind: input, shape index: {}]
  %s2 = inlined_call_operand.hbm [shape: f32[4,2,256], index: 2, kind: output, shape index: {}]
  %s3 = sld [smem:[#allocation0]]
  $region45: #{tpu_custom_call.1} parent=0
    _
  %s5 = ssub.s32 1, %s3
  %s6 = scalar_select 0, %s5, %s3
  $region1: #{tpu_custom_call.1} parent=0
    #allocation2 [shape = 'u8[8192]{0}', space=vmem, size = 0x2000, scoped, tag = 'input window, operand 0']
    #allocation3 [shape = 's32[2]{0}', space=sflag, size = 0x8, scoped, tag = 'scoped memory for tpu_custom_call.1']
    #allocation4 [shape = 's32[2]{0}', space=sflag, size = 0x8, scoped, tag = 'scoped memory for tpu_custom_call.1']
    #allocation5 [shape = 'u8[8192]{0}', space=vmem, size = 0x2000, scoped, tag = 'output window, operand 0']
    %7 = vsyncpa [#allocation3], 0
    %s8 = scalar_lea.sflag [#allocation3], 1
    %9 = vsyncpa %s8, 0
    %10 = vsyncpa [#allocation4], 0
    %s11 = scalar_lea.sflag [#allocation4], 1
    %12 = vsyncpa %s11, 0
    loop: start=0, step=1, limit=4
    $region2: #{tpu_custom_call.1} parent=1 // loop_pre_header
      _
    $region3: #{tpu_custom_call.1} parent=1 // loop_header
      %s14 = sphi 0, %s18
      %p15 = scmp.ge.s32.totalorder %s14, 4
      %s24 = sphi 0, %s26
      %s27 = sphi 0, %s24
      %s28 = sphi 0, %s27
      %s44 = sphi 0, %s28
      %s50 = sphi 0, %s52
      %s53 = sphi 0, %s50
      %s54 = sphi 0, %s53
      %s70 = sphi 0, %s54
      %s76 = sphi 0, %s78
      %s79 = sphi 0, %s76
      %s80 = sphi 0, %s79
      %s96 = sphi 0, %s80
    $region4: #{tpu_custom_call.1} parent=1 // loop_header_branch
      %17 = sbr.rel (%p15) target = $region8
    $region5: #{tpu_custom_call.1} parent=1 // loop_body
      %s19 = ssub.s32 %s14, 1
      %s20 = ssub.s32 %s14, 2
      %s21 = sadd.s32 %s14, 1
      %s22 = ssub.s32 %s14, %s21
      %p23 = scmp.eq.s32.totalorder %s22, 0
      %s25 = sadd.s32 %s24, 1
      %s26 = scalar_select %p23, %s24, %s25
      %p29 = pneg %p23
      %p30 = scmp.eq.s32.totalorder %s14, 1
      %p31 = por %p29, %p30
      %p32 = scmp.ne.s32.totalorder %s24, %s27
      %p33 = scmp.eq.s32.totalorder %s14, 0
      %p34 = por %p32, %p33
      %p35 = scmp.ne.s32.totalorder %s24, %s27
      %p36 = scmp.eq.s32.totalorder %s19, 1
      %p37 = por %p35, %p36
      %p38 = scmp.ne.s32.totalorder %s27, %s28
      %p39 = scmp.eq.s32.totalorder %s19, 0
      %p40 = por %p38, %p39
      %p41 = scmp.ne.s32.totalorder %s27, %s28
      %p42 = scmp.eq.s32.totalorder %s20, 1
      %p43 = por %p41, %p42
      %p45 = scmp.ne.s32.totalorder %s28, %s44
      %p46 = scmp.eq.s32.totalorder %s20, 0
      %p47 = por %p45, %p46
      %s48 = ssub.s32 %s14, %s21
      %p49 = scmp.eq.s32.totalorder %s48, 0
      %s51 = sadd.s32 %s50, 1
      %s52 = scalar_select %p49, %s50, %s51
      %p55 = pneg %p49
      %p56 = scmp.eq.s32.totalorder %s14, 1
      %p57 = por %p55, %p56
      %p58 = scmp.ne.s32.totalorder %s50, %s53
      %p59 = scmp.eq.s32.totalorder %s14, 0
      %p60 = por %p58, %p59
      %p61 = scmp.ne.s32.totalorder %s50, %s53
      %p62 = scmp.eq.s32.totalorder %s19, 1
      %p63 = por %p61, %p62
      %p64 = scmp.ne.s32.totalorder %s53, %s54
      %p65 = scmp.eq.s32.totalorder %s19, 0
      %p66 = por %p64, %p65
      %p67 = scmp.ne.s32.totalorder %s53, %s54
      %p68 = scmp.eq.s32.totalorder %s20, 1
      %p69 = por %p67, %p68
      %p71 = scmp.ne.s32.totalorder %s54, %s70
      %p72 = scmp.eq.s32.totalorder %s20, 0
      %p73 = por %p71, %p72
      %s74 = ssub.s32 %s14, %s21
      %p75 = scmp.eq.s32.totalorder %s74, 0
      %s77 = sadd.s32 %s76, 1
      %s78 = scalar_select %p75, %s76, %s77
      %p81 = pneg %p75
      %p82 = scmp.eq.s32.totalorder %s14, 1
      %p83 = por %p81, %p82
      %p84 = scmp.ne.s32.totalorder %s76, %s79
      %p85 = scmp.eq.s32.totalorder %s14, 0
      %p86 = por %p84, %p85
      %p87 = scmp.ne.s32.totalorder %s76, %s79
      %p88 = scmp.eq.s32.totalorder %s19, 1
      %p89 = por %p87, %p88
      %p90 = scmp.ne.s32.totalorder %s79, %s80
      %p91 = scmp.eq.s32.totalorder %s19, 0
      %p92 = por %p90, %p91
      %p93 = scmp.ne.s32.totalorder %s79, %s80
      %p94 = scmp.eq.s32.totalorder %s20, 1
      %p95 = por %p93, %p94
      %p97 = scmp.ne.s32.totalorder %s80, %s96
      %p98 = scmp.eq.s32.totalorder %s20, 0
      %p99 = por %p97, %p98
      %p100 = scmp.le.s32.totalorder 1, %s14
      %p101 = scmp.lt.s32.totalorder %s14, 3
      %p102 = pnand %p100, %p101
      %p103 = pneg %p102
      // Predicated region
      $region9: #{tpu_custom_call.1} parent=5 // pred_check
        _
      $region10: #{tpu_custom_call.1} parent=5 // pred_check_branch
        %105 = sbr.rel (%p102) target = $region12
      $region11: #{tpu_custom_call.1} parent=5 // pred_region
        %s106 = ssub.s32 %s14, 1
      $region12: #{tpu_custom_call.1} parent=5 // pred_fallthru
        _
      %p107 = scmp.lt.s32.totalorder %s14, 2
      // Predicated region
      $region13: #{tpu_custom_call.1} parent=5 // pred_check
        %p108 = pneg %p107
      $region14: #{tpu_custom_call.1} parent=5 // pred_check_branch
        %110 = sbr.rel (%p108) target = $region16
      $region15: #{tpu_custom_call.1} parent=5 // pred_region
        // Predicated region
        $region17: #{tpu_custom_call.1} parent=15 // pred_check
          %p111 = pneg %p34
        $region18: #{tpu_custom_call.1} parent=15 // pred_check_branch
          %113 = sbr.rel (%p111) target = $region20
        $region19: #{tpu_custom_call.1} parent=15 // pred_region
          %s114 = sand.u32 %s24, 1
          %s115 = scalar_lea.sflag [#allocation3], %s114
          %s116 = sand.u32 %s24, 1
          %s117 = smul.addr %s116, 8
          %s118 = scalar_lea.vmem [#allocation2], %s117
          %s119 = smul.u32 2, %s14
          %121 = vsyncadd %s115, 0
          %s122 = smul.addr %s119, 2
          %s123 = smul.addr %s122, 2
          %s124 = scalar_lea.hbm %s0, %s123
          %s125 = sshll.u32 %s124, 4
          %s126 = int_to_ptr.hbm [resolvable:$true] %s125
          %s127 = sshll.u32 %s118, 4
          %s128 = int_to_ptr.vmem [resolvable:$true] %s127
          %133 = dma.hbm_to_vmem [thread:$0]  %s126, 128, %s128, %s115, 64, 64, 4
        $region20: #{tpu_custom_call.1} parent=15 // pred_fallthru
          _
        // Predicated region
        $region21: #{tpu_custom_call.1} parent=15 // pred_check
          %p134 = pneg %p60
        $region22: #{tpu_custom_call.1} parent=15 // pred_check_branch
          %136 = sbr.rel (%p134) target = $region24
        $region23: #{tpu_custom_call.1} parent=15 // pred_region
          %s137 = smul.u32 2, %s14
          %p138 = scmp.lt.s32.totalorder %s137, 3
          %s139 = scalar_select %p138, %s137, 3
          %s140 = smul.addr %s139, 2
          %s141 = scalar_lea.vmem %s1, %s140
          %s142 = smul.u32 2, %s14
        $region24: #{tpu_custom_call.1} parent=15 // pred_fallthru
          _
      $region16: #{tpu_custom_call.1} parent=5 // pred_fallthru
        _
      %p143 = scmp.le.s32.totalorder 1, %s14
      %p144 = scmp.lt.s32.totalorder %s14, 3
      %p145 = pnand %p143, %p144
      %p146 = pneg %p145
      // Predicated region
      $region25: #{tpu_custom_call.1} parent=5 // pred_check
        _
      $region26: #{tpu_custom_call.1} parent=5 // pred_check_branch
        %148 = sbr.rel (%p145) target = $region28
      $region27: #{tpu_custom_call.1} parent=5 // pred_region
        %s149 = ssub.s32 %s14, 1
        %s150 = sand.u32 %s27, 1
        %s151 = scalar_lea.sflag [#allocation3], %s150
        %s152 = sand.u32 %s27, 1
        %s153 = smul.addr %s152, 8
        %s154 = scalar_lea.vmem [#allocation2], %s153
        // Predicated region
        $region29: #{tpu_custom_call.1} parent=27 // pred_check
          %p155 = pneg %p40
        $region30: #{tpu_custom_call.1} parent=27 // pred_check_branch
          %157 = sbr.rel (%p155) target = $region32
        $region31: #{tpu_custom_call.1} parent=27 // pred_region
          %159 = dma.done %s151, 128
        $region32: #{tpu_custom_call.1} parent=27 // pred_fallthru
          _
        %s160 = sand.u32 %s27, 1
        %s161 = scalar_lea.sflag [#allocation3], %s160
        %s162 = sand.u32 %s27, 1
        %s163 = smul.addr %s162, 8
        %s164 = scalar_lea.vmem [#allocation2], %s163
        %p165 = pneg %p40
        %p166 = pneg %p37
        %s167 = smul.u32 2, %s19
        %p168 = scmp.lt.s32.totalorder %s167, 3
        %s169 = scalar_select %p168, %s167, 3
        %s170 = smul.addr %s169, 2
        %s171 = scalar_lea.vmem %s1, %s170
        %p172 = pneg %p66
        %p173 = pneg %p63
        %p174 = pneg %p92
        %p175 = pneg %p89
        %s176 = sand.u32 %s79, 1
        %s177 = scalar_lea.sflag [#allocation4], %s176
        %s178 = sand.u32 %s79, 1
        %s179 = smul.addr %s178, 8
        %s180 = scalar_lea.vmem [#allocation5], %s179
        %s181 = smul.u32 2, %s19
        %s182 = smul.u32 2, %s19
        %p183 = scmp.lt.s32.totalorder %s182, 3
        %s184 = scalar_select %p183, %s182, 3
        %s185 = smul.addr %s184, 2
        %s186 = scalar_lea.vmem %s1, %s185
        %s187 = smul.u32 2, %s19
        %s188 = smul.u32 2, %s19
        %v189 = vld [vmem:[%s154] sm:$0xf]
        %v190 = vld [vmem:[%s154 + $0x4] sm:$0xf]
        %193 = vst [vmem:[#allocation1] ss:$4 sm:$0xff] %v189
        %v194 = vld.sshfl [vmem:[#allocation1] sm:$0xff pattern:$0x73625140]
        %v195 = vld.sshfl [vmem:[#allocation1 + $0x8] sm:$0xff pattern:$0x73625140]
        %s196 = scalar_lea.vmem [#allocation1], 32
        %197 = vst [vmem:[%s196] ss:$4 sm:$0xff] %v190
        %v198 = vld.sshfl [vmem:[#allocation1 + $0x20] sm:$0xff pattern:$0x73625140]
        %v199 = vld.sshfl [vmem:[#allocation1 + $0x28] sm:$0xff pattern:$0x73625140]
        %vm204 = vcmask 1041408
        %v205 = vsel %vm204, %v194, 0.0
        %v206 = vsel %vm204, %v195, 0.0
        %v207 = vadd.f32 %v205, %v206
        %208 = vadd.xlane.f32.xlu0 %v207
        %v209 = vpop.xlane.xlu0 %208
        %v210 = vsel %vm204, %v198, 0.0
        %v211 = vsel %vm204, %v199, 0.0
        %v212 = vadd.f32 %v210, %v211
        %213 = vadd.xlane.f32.xlu0 %v212
        %v214 = vpop.xlane.xlu0 %213
        %v215 = vmul.f32 %v189, %v189
        %v216 = vmul.f32 %v190, %v190
        %219 = vst [vmem:[#allocation1] ss:$4 sm:$0xff] %v215
        %v220 = vld.sshfl [vmem:[#allocation1] sm:$0xff pattern:$0x73625140]
        %v221 = vld.sshfl [vmem:[#allocation1 + $0x8] sm:$0xff pattern:$0x73625140]
        %s222 = scalar_lea.vmem [#allocation1], 32
        %223 = vst [vmem:[%s222] ss:$4 sm:$0xff] %v216
        %v224 = vld.sshfl [vmem:[#allocation1 + $0x20] sm:$0xff pattern:$0x73625140]
        %v225 = vld.sshfl [vmem:[#allocation1 + $0x28] sm:$0xff pattern:$0x73625140]
        %v230 = vsel %vm204, %v220, 0.0
        %v231 = vsel %vm204, %v221, 0.0
        %v232 = vadd.f32 %v230, %v231
        %233 = vadd.xlane.f32.xlu0 %v232
        %v234 = vpop.xlane.xlu0 %233
        %v235 = vsel %vm204, %v224, 0.0
        %v236 = vsel %vm204, %v225, 0.0
        %v237 = vadd.f32 %v235, %v236
        %238 = vadd.xlane.f32.xlu0 %v237
        %v239 = vpop.xlane.xlu0 %238
        %v240 = vsel %vm204, %v209, 0.0
        %v241 = vrot.slane %v240, 4
        %v242 = vadd.f32 %v240, %v241
        %v243 = vrot.slane %v242, 2
        %v244 = vadd.f32 %v242, %v243
        %v245 = vrot.slane %v244, 1
        %v246 = vadd.f32 %v244, %v245
        %v247 = vsel %vm204, %v214, 0.0
        %v248 = vrot.slane %v247, 4
        %v249 = vadd.f32 %v247, %v248
        %v250 = vrot.slane %v249, 2
        %v251 = vadd.f32 %v249, %v250
        %v252 = vrot.slane %v251, 1
        %v253 = vadd.f32 %v251, %v252
        %v254 = vsel %vm204, %v234, 0.0
        %v255 = vrot.slane %v254, 4
        %v256 = vadd.f32 %v254, %v255
        %v257 = vrot.slane %v256, 2
        %v258 = vadd.f32 %v256, %v257
        %v259 = vrot.slane %v258, 1
        %v260 = vadd.f32 %v258, %v259
        %v261 = vsel %vm204, %v239, 0.0
        %v262 = vrot.slane %v261, 4
        %v263 = vadd.f32 %v261, %v262
        %v264 = vrot.slane %v263, 2
        %v265 = vadd.f32 %v263, %v264
        %v266 = vrot.slane %v265, 1
        %v267 = vadd.f32 %v265, %v266
        %v268 = vmul.f32 %v246, 0.001953125
        %v269 = vmul.f32 %v253, 0.001953125
        %v270 = vmul.f32 %v260, 0.001953125
        %v271 = vmul.f32 %v267, 0.001953125
        %v272 = vmul.f32 %v268, %v268
        %v273 = vmul.f32 %v269, %v269
        %v274 = vsub.f32 %v270, %v272
        %v275 = vsub.f32 %v271, %v273
        %v276 = vmax.f32 %v274, 0.0
        %v277 = vmax.f32 %v275, 0.0
        %v278 = vadd.f32 %v276, 1e-05
        %v279 = vadd.f32 %v277, 1e-05
        %v280 = vrsqrt.pop %v278
        %v281 = vmul.f32 %v280, %v278
        %v282 = vmul.f32 %v281, %v280
        %v283 = vmul.f32 0.5, %v282
        %v284 = vsub.f32 1.5, %v283
        %v285 = vmul.f32 %v280, %v284
        %vm286 = vweird.f32 %v278
        %vm287 = vweird.f32 %v280
        %vm288 = vmor %vm286, %vm287
        %v289 = vsel %vm288, %v280, %v285
        %v290 = vrsqrt.pop %v279
        %v291 = vmul.f32 %v290, %v279
        %v292 = vmul.f32 %v291, %v290
        %v293 = vmul.f32 0.5, %v292
        %v294 = vsub.f32 1.5, %v293
        %v295 = vmul.f32 %v290, %v294
        %vm296 = vweird.f32 %v279
        %vm297 = vweird.f32 %v290
        %vm298 = vmor %vm296, %vm297
        %v299 = vsel %vm298, %v290, %v295
        %v300 = vld [vmem:[%s186] sm:$0x3]
        %v301 = vld [vmem:[%s186 + $0x2] sm:$0x3]
        %v302 = vmul.f32 %v289, %v300
        %v303 = vmul.f32 %v299, %v301
        %v304 = vmul.f32 %v268, %v302
        %v305 = vmul.f32 %v269, %v303
        %308 = vrot.lane.b32.xlu0 %v304, 1
        %v309 = vpop.permute.xlu0 %308
        %310 = vrot.lane.b32.xlu0 %v305, 1
        %v311 = vpop.permute.xlu0 %310
        %v314 = vsub.f32 %v300, %v309
        %v315 = vsub.f32 %v301, %v311
        %317 = vset.pattern.permute.xlu0 0
        %318 = vperm.xlu0 %317, %v302
        %v319 = vpop.permute.xlu0 %318
        %321 = vset.pattern.permute.xlu0 0
        %322 = vperm.xlu0 %321, %v303
        %v323 = vpop.permute.xlu0 %322
        %v325 = vunpack.c.l.s4 269488144
        %v326 = vunpack.c.0.s8 %v325
        %v327 = vperm.slane %v319, %v326
        %v329 = vunpack.c.l.s4 269488144
        %v330 = vunpack.c.0.s8 %v329
        %v331 = vperm.slane %v323, %v330
        %v334 = vmul.f32 %v189, %v327
        %v335 = vmul.f32 %v190, %v331
        %337 = vset.pattern.permute.xlu0 1
        %338 = vperm.xlu0 %337, %v314
        %v339 = vpop.permute.xlu0 %338
        %341 = vset.pattern.permute.xlu0 1
        %342 = vperm.xlu0 %341, %v315
        %v343 = vpop.permute.xlu0 %342
        %v345 = vunpack.c.l.s4 269488144
        %v346 = vunpack.c.0.s8 %v345
        %v347 = vperm.slane %v339, %v346
        %v349 = vunpack.c.l.s4 269488144
        %v350 = vunpack.c.0.s8 %v349
        %v351 = vperm.slane %v343, %v350
        %v354 = vadd.f32 %v334, %v347
        %v355 = vadd.f32 %v335, %v351
        %356 = vst [vmem:[%s180] sm:$0xf] %v354
        %357 = vst [vmem:[%s180 + $0x4] sm:$0xf] %v355
        %s358 = sand.u32 %s79, 1
        %s359 = scalar_lea.sflag [#allocation4], %s358
        %s360 = sand.u32 %s79, 1
        %s361 = smul.addr %s360, 8
        %s362 = scalar_lea.vmem [#allocation5], %s361
        // Predicated region
        $region33: #{tpu_custom_call.1} parent=27 // pred_check
          %p363 = pneg %p89
        $region34: #{tpu_custom_call.1} parent=27 // pred_check_branch
          %365 = sbr.rel (%p363) target = $region36
        $region35: #{tpu_custom_call.1} parent=27 // pred_region
          %s366 = smul.u32 2, %s19
          %368 = vsyncadd %s359, 0
          %s369 = smul.addr %s366, 2
          %s370 = smul.addr %s369, 2
          %s371 = scalar_lea.hbm %s2, %s370
          %s372 = sshll.u32 %s362, 4
          %s373 = int_to_ptr.vmem [resolvable:$true] %s372
          %s374 = sshll.u32 %s371, 4
          %s375 = int_to_ptr.hbm [resolvable:$true] %s374
          %380 = dma.vmem_to_hbm [thread:$0]  %s373, 128, %s375, %s359, 64, 64, 4
        $region36: #{tpu_custom_call.1} parent=27 // pred_fallthru
          _
      $region28: #{tpu_custom_call.1} parent=5 // pred_fallthru
        _
      %p381 = scmp.le.s32.totalorder 2, %s14
      // Predicated region
      $region37: #{tpu_custom_call.1} parent=5 // pred_check
        %p382 = pneg %p381
      $region38: #{tpu_custom_call.1} parent=5 // pred_check_branch
        %384 = sbr.rel (%p382) target = $region40
      $region39: #{tpu_custom_call.1} parent=5 // pred_region
        %s385 = ssub.s32 %s14, 2
        // Predicated region
        $region41: #{tpu_custom_call.1} parent=39 // pred_check
          %p386 = pneg %p95
        $region42: #{tpu_custom_call.1} parent=39 // pred_check_branch
          %388 = sbr.rel (%p386) target = $region44
        $region43: #{tpu_custom_call.1} parent=39 // pred_region
          %s389 = sand.u32 %s80, 1
          %s390 = scalar_lea.sflag [#allocation4], %s389
          %s391 = sand.u32 %s80, 1
          %s392 = smul.addr %s391, 8
          %s393 = scalar_lea.vmem [#allocation5], %s392
          %395 = dma.done %s390, 128
        $region44: #{tpu_custom_call.1} parent=39 // pred_fallthru
          _
      $region40: #{tpu_custom_call.1} parent=5 // pred_fallthru
        _
    $region6: #{tpu_custom_call.1} parent=1 // loop_footer
      %s18 = sadd.s32 1, %s14
    $region7: #{tpu_custom_call.1} parent=1 // loop_footer_branch
      %13 = sbr.rel target = $region3
    $region8: #{tpu_custom_call.1} parent=1 // loop_exit
      _
    %396 = vsyncpa [#allocation3], 1
    %s397 = scalar_lea.sflag [#allocation3], 1
    %398 = vsyncpa %s397, 1
    %399 = vsyncpa [#allocation4], 1
    %s400 = scalar_lea.sflag [#allocation4], 1
    %401 = vsyncpa %s400, 1

</llo_original>
